<compile_context>
chip_gen: v6e
topology: v6e:2x2x1
jax: 0.10.0
libtpu: 0.0.40
codegen_flags: <defaults>
</compile_context>

<pallas_src>
import functools

import jax
import jax.numpy as jnp
from jax.experimental import pallas as pl
from jax.experimental.pallas import tpu as pltpu


_LANE = 128
_TARGET_BLOCK_BYTES = 2 * 1024 * 1024   # ~2 MiB per input tile (per buffer)
_FF_MAX = 4096                          # cap on lane-axis tile width


def _round_up(x, m):
    return ((x + m - 1) // m) * m


def _masked_sqerr_kernel(nfb_ref, thr_ref, x_ref, y_ref, out_ref, *, ff):
    """Grid = (batch_blocks, feature_blocks), both parallel.

    nfb_ref : SMEM (n_bb,) int32  -- #feature-blocks containing valid data
    thr_ref : VMEM (Bb, 1) int32  -- per-row validity threshold (= lengths*D)
    x_ref   : VMEM (Bb, Ff) input tile (native dtype)
    y_ref   : VMEM (Bb, Ff) target tile (native dtype)
    out_ref : VMEM (Bb, 128) f32  -- this block's lane-dense partial sums
    """
    i = pl.program_id(0)          # batch-block index
    j = pl.program_id(1)          # flattened (time*feature) block index
    bb = x_ref.shape[0]
    n_chunks = ff // _LANE

    @pl.when(j < nfb_ref[i])
    def _compute():
        # Per-row threshold shifted into this feature block's local frame.
        thr = thr_ref[...] - j * ff                                   # (Bb, 1)
        base = jax.lax.broadcasted_iota(jnp.int32, (bb, _LANE), 1)    # (Bb, 128)
        part = jnp.zeros((bb, _LANE), jnp.float32)
        # Fold aligned 128-lane chunks into a single register-resident
        # (Bb, 128) partial: static ref slices are free views, adds are VPU.
        for c in range(n_chunks):
            lo = c * _LANE
            x = x_ref[:, lo:lo + _LANE].astype(jnp.float32)
            y = y_ref[:, lo:lo + _LANE].astype(jnp.float32)
            d = x - y
            valid = (base + lo) < thr
            part = part + jnp.where(valid, d * d, jnp.float32(0.0))
        out_ref[...] = part

    @pl.when(j >= nfb_ref[i])
    def _skip():
        # Fully-invalid feature block: its input DMA was elided via the
        # clamped index_map; just publish zeros for its output column block.
        out_ref[...] = jnp.zeros_like(out_ref)


def masked_mse_loss(inputs, target, lengths):
    """MaskedLoss(nn.MSELoss()): mean squared error over valid timesteps.

    inputs, target: (B, T, ...) float arrays; lengths: (B,) integer.
    Returns a scalar float32.
    """
    assert inputs.shape == target.shape
    B, T = inputs.shape[:2]
    D = 1
    for s in inputs.shape[2:]:
        D *= int(s)
    lengths = lengths.astype(jnp.int32)
    itemsize = jnp.dtype(inputs.dtype).itemsize

    # ---- lane-dense layout: fold (T, D) into one axis, pad to lane multiple
    F = T * D
    Ff = min(_round_up(F, _LANE), _FF_MAX)
    F_pad = _round_up(F, Ff)

    rows = max(1, _TARGET_BLOCK_BYTES // (Ff * itemsize))
    if rows >= B:
        Bb, B_pad = B, B
    else:
        Bb = max(8, (rows // 8) * 8)      # keep sublane-aligned batch blocks
        B_pad = _round_up(B, Bb)

    n_bb = B_pad // Bb
    n_ff = F_pad // Ff

    x2 = inputs.reshape(B, F)
    y2 = target.reshape(B, F)
    if F_pad != F or B_pad != B:
        pad = ((0, B_pad - B), (0, F_pad - F))
        x2 = jnp.pad(x2, pad)             # zero padding -> diff = 0, masked anyway
        y2 = jnp.pad(y2, pad)

    # Per-row validity threshold on the flattened axis.
    thr = lengths * jnp.int32(D)                      # (B,)
    thr = jnp.pad(thr, (0, B_pad - B))                # padded rows -> length 0
    thr2 = thr.reshape(B_pad, 1)

    # Number of feature blocks holding any valid element, per batch block
    # (>= 1 so the clamped index_map never goes negative).
    blk_max = jnp.max(thr.reshape(n_bb, Bb), axis=1)
    nfb = jnp.clip((blk_max + (Ff - 1)) // Ff, 1, n_ff).astype(jnp.int32)

    kernel = functools.partial(_masked_sqerr_kernel, ff=Ff)

    partials = pl.pallas_call(
        kernel,
        out_shape=jax.ShapeDtypeStruct((B_pad, _LANE * n_ff), jnp.float32),
        grid_spec=pltpu.PrefetchScalarGridSpec(
            num_scalar_prefetch=1,        # nfb -> SMEM, drives block skipping
            grid=(n_bb, n_ff),
            in_specs=[
                pl.BlockSpec((Bb, 1), lambda i, j, nfb: (i, 0)),
                pl.BlockSpec((Bb, Ff),
                             lambda i, j, nfb: (i, jnp.minimum(j, nfb[i] - 1))),
                pl.BlockSpec((Bb, Ff),
                             lambda i, j, nfb: (i, jnp.minimum(j, nfb[i] - 1))),
            ],
            out_specs=pl.BlockSpec((Bb, _LANE), lambda i, j, nfb: (i, j)),
        ),
        compiler_params=pltpu.CompilerParams(
            # Every grid point writes its own output block -> fully parallel;
            # on v7x either axis can be split across the 2 TensorCores.
            dimension_semantics=("parallel", "parallel"),
            vmem_limit_bytes=32 * 1024 * 1024,
        ),
    )(nfb, thr2, x2, y2)

    total = jnp.sum(partials, dtype=jnp.float32)
    # Denominator = number of gathered elements (clamp L to T like PyTorch's
    # boolean-mask gather); computed outside the kernel -- it is data-free.
    count = jnp.sum(jnp.minimum(lengths, T)).astype(jnp.float32) * jnp.float32(D)
    return total / count


def _reference(inputs, target, lengths):
    B, T = inputs.shape[:2]
    x = inputs.reshape(B, T, -1).astype(jnp.float32)
    y = target.reshape(B, T, -1).astype(jnp.float32)
    D = x.shape[-1]
    mask = jnp.arange(T)[None, :] < lengths[:, None]
    diff2 = (x - y) ** 2
    total = jnp.sum(diff2 * mask[:, :, None])
    count = jnp.sum(jnp.minimum(lengths, T)).astype(jnp.float32) * D
    return total / count


if __name__ == "__main__":
    key = jax.random.PRNGKey(0)

    # Case 1: canonical small shape (B, T, D) = (2, 8, 32), lane-dense fold.
    B, T, D = 2, 8, 32
    k1, k2 = jax.random.split(key)
    inputs = jax.random.normal(k1, (B, T, D), dtype=jnp.float32)
    target = jax.random.normal(k2, (B, T, D), dtype=jnp.float32)
    lengths = jnp.array([5, 8], dtype=jnp.int32)

    loss = masked_mse_loss(inputs, target, lengths)
    jax.block_until_ready(loss)
    ref = _reference(inputs, target, lengths)
    assert jnp.allclose(loss, ref, rtol=1e-5, atol=1e-5), (loss, ref)

    # Case 2: exercises lane padding (T*D not multiple of 128), a zero length,
    # and a length > T (clamped count, matching PyTorch gather semantics).
    B2, T2, D2 = 4, 5, 24
    k3, k4 = jax.random.split(k1)
    inputs2 = jax.random.normal(k3, (B2, T2, D2), dtype=jnp.float32)
    target2 = jax.random.normal(k4, (B2, T2, D2), dtype=jnp.float32)
    lengths2 = jnp.array([3, 7, 0, 2], dtype=jnp.int32)

    loss2 = masked_mse_loss(inputs2, target2, lengths2)
    jax.block_until_ready(loss2)
    ref2 = _reference(inputs2, target2, lengths2)
    assert jnp.allclose(loss2, ref2, rtol=1e-5, atol=1e-5), (loss2, ref2)

    # Case 3: multiple feature blocks (n_ff = 2) with all lengths small enough
    # that the second feature block is skipped (exercises the zero-store path
    # and the clamped index_map).
    B3, T3, D3 = 8, 40, 128
    k5, k6 = jax.random.split(k3)
    inputs3 = jax.random.normal(k5, (B3, T3, D3), dtype=jnp.float32)
    target3 = jax.random.normal(k6, (B3, T3, D3), dtype=jnp.float32)
    lengths3 = jnp.array([12, 30, 0, 7, 25, 3, 18, 9], dtype=jnp.int32)

    loss3 = masked_mse_loss(inputs3, target3, lengths3)
    jax.block_until_ready(loss3)
    ref3 = _reference(inputs3, target3, lengths3)
    assert jnp.allclose(loss3, ref3, rtol=1e-5, atol=1e-5), (loss3, ref3)

    # Case 4: bf16 inputs (native-dtype HBM streaming, f32 in-register math),
    # with both feature blocks active and a length > T.
    B4, T4, D4 = 4, 40, 128
    k7, k8 = jax.random.split(k5)
    inputs4 = jax.random.normal(k7, (B4, T4, D4), dtype=jnp.float32).astype(jnp.bfloat16)
    target4 = jax.random.normal(k8, (B4, T4, D4), dtype=jnp.float32).astype(jnp.bfloat16)
    lengths4 = jnp.array([45, 40, 13, 0], dtype=jnp.int32)

    loss4 = masked_mse_loss(inputs4, target4, lengths4)
    jax.block_until_ready(loss4)
    ref4 = _reference(inputs4, target4, lengths4)
    assert jnp.allclose(loss4, ref4, rtol=1e-4, atol=1e-4), (loss4, ref4)

    # TODO(synk): generic `loss_fn` is not translatable; MSE (mean) is baked in.
    print("KERNEL_OK")
</pallas_src>

<mosaic_0001>
module attributes {stable_mosaic.version = 11 : i64} {
  func.func @_masked_sqerr_kernel(%arg0: i32, %arg1: i32, %arg2: memref<1xi32, #tpu.memory_space<smem>>, %arg3: memref<2x1xi32, #tpu.memory_space<vmem>>, %arg4: memref<2x256xf32, #tpu.memory_space<vmem>>, %arg5: memref<2x256xf32, #tpu.memory_space<vmem>>, %arg6: memref<2x128xf32, #tpu.memory_space<vmem>>) attributes {dimension_semantics = [#tpu.dimension_semantics<parallel>, #tpu.dimension_semantics<parallel>], iteration_bounds = array<i64: 1, 1>, scalar_prefetch = 1 : i64, scratch_operands = 0 : i64, tpu.core_type = #tpu.core_type<tc>, window_params = [{transform_indices = @transform_0, window_bounds = array<i64: 2, 1>}, {transform_indices = @transform_1, window_bounds = array<i64: 2, 256>}, {transform_indices = @transform_2, window_bounds = array<i64: 2, 256>}, {transform_indices = @transform_3, window_bounds = array<i64: 2, 128>}]} {
    %0 = arith.index_cast %arg0 : i32 to index
    %1 = memref.load %arg2[%0] : memref<1xi32, #tpu.memory_space<smem>>
    %2 = arith.cmpi slt, %arg1, %1 : i32
    %3 = arith.extui %2 : i1 to i32
    %c0_i32 = arith.constant 0 : i32
    %4 = arith.cmpi ne, %3, %c0_i32 : i32
    scf.if %4 {
      %c0 = arith.constant 0 : index
      %c0_1 = arith.constant 0 : index
      %10 = vector.load %arg3[%c0, %c0_1] : memref<2x1xi32, #tpu.memory_space<vmem>>, vector<2x1xi32>
      %c256_i32 = arith.constant 256 : i32
      %11 = arith.muli %arg1, %c256_i32 : i32
      %12 = vector.broadcast %11 : i32 to vector<2x1xi32>
      %13 = arith.subi %10, %12 : vector<2x1xi32>
      %14 = tpu.iota {dimensions = array<i32: 1>} : vector<2x128xi32>
      %cst = arith.constant 0.000000e+00 : f32
      %15 = vector.broadcast %cst : f32 to vector<2x128xf32>
      %c0_2 = arith.constant 0 : index
      %c0_3 = arith.constant 0 : index
      %16 = vector.load %arg4[%c0_2, %c0_3] : memref<2x256xf32, #tpu.memory_space<vmem>>, vector<2x128xf32>
      %c0_4 = arith.constant 0 : index
      %c0_5 = arith.constant 0 : index
      %17 = vector.load %arg5[%c0_4, %c0_5] : memref<2x256xf32, #tpu.memory_space<vmem>>, vector<2x128xf32>
      %18 = arith.subf %16, %17 : vector<2x128xf32>
      %c0_i32_6 = arith.constant 0 : i32
      %19 = vector.broadcast %c0_i32_6 : i32 to vector<2x128xi32>
      %20 = arith.addi %14, %19 : vector<2x128xi32>
      %21 = vector.broadcast %13 : vector<2x1xi32> to vector<2x128xi32>
      %22 = arith.cmpi slt, %20, %21 : vector<2x128xi32>
      %23 = arith.mulf %18, %18 : vector<2x128xf32>
      %cst_7 = arith.constant 0.000000e+00 : f32
      %24 = vector.broadcast %cst_7 : f32 to vector<2x128xf32>
      %25 = arith.select %22, %23, %24 : vector<2x128xi1>, vector<2x128xf32>
      %26 = arith.addf %15, %25 : vector<2x128xf32>
      %c0_8 = arith.constant 0 : index
      %c128 = arith.constant 128 : index
      %27 = vector.load %arg4[%c0_8, %c128] : memref<2x256xf32, #tpu.memory_space<vmem>>, vector<2x128xf32>
      %c0_9 = arith.constant 0 : index
      %c128_10 = arith.constant 128 : index
      %28 = vector.load %arg5[%c0_9, %c128_10] : memref<2x256xf32, #tpu.memory_space<vmem>>, vector<2x128xf32>
      %29 = arith.subf %27, %28 : vector<2x128xf32>
      %c128_i32 = arith.constant 128 : i32
      %30 = vector.broadcast %c128_i32 : i32 to vector<2x128xi32>
      %31 = arith.addi %14, %30 : vector<2x128xi32>
      %32 = vector.broadcast %13 : vector<2x1xi32> to vector<2x128xi32>
      %33 = arith.cmpi slt, %31, %32 : vector<2x128xi32>
      %34 = arith.mulf %29, %29 : vector<2x128xf32>
      %cst_11 = arith.constant 0.000000e+00 : f32
      %35 = vector.broadcast %cst_11 : f32 to vector<2x128xf32>
      %36 = arith.select %33, %34, %35 : vector<2x128xi1>, vector<2x128xf32>
      %37 = arith.addf %26, %36 : vector<2x128xf32>
      %c0_12 = arith.constant 0 : index
      %c0_13 = arith.constant 0 : index
      %38 = vector.load %arg6[%c0_12, %c0_13] : memref<2x128xf32, #tpu.memory_space<vmem>>, vector<2x128xf32>
      tpu.vector_store %arg6[%c0_12, %c0_13], %37 {strides = array<i32>} : memref<2x128xf32, #tpu.memory_space<vmem>>, vector<2x128xf32>,
    } else {
    }
    %5 = arith.index_cast %arg0 : i32 to index
    %6 = memref.load %arg2[%5] : memref<1xi32, #tpu.memory_space<smem>>
    %7 = arith.cmpi sge, %arg1, %6 : i32
    %8 = arith.extui %7 : i1 to i32
    %c0_i32_0 = arith.constant 0 : i32
    %9 = arith.cmpi ne, %8, %c0_i32_0 : i32
    scf.if %9 {
      %cst = arith.constant 0.000000e+00 : f32
      %10 = vector.broadcast %cst : f32 to vector<2x128xf32>
      %c0 = arith.constant 0 : index
      %c0_1 = arith.constant 0 : index
      %11 = vector.load %arg6[%c0, %c0_1] : memref<2x128xf32, #tpu.memory_space<vmem>>, vector<2x128xf32>
      tpu.vector_store %arg6[%c0, %c0_1], %10 {strides = array<i32>} : memref<2x128xf32, #tpu.memory_space<vmem>>, vector<2x128xf32>,
    } else {
    }
    return
  }
  func.func @transform_0(%arg0: i32, %arg1: i32, %arg2: memref<1xi32, #tpu.memory_space<smem>>) -> (i32, i32) {
    %c0_i32 = arith.constant 0 : i32
    %c0_i32_0 = arith.constant 0 : i32
    return %arg0, %c0_i32 : i32, i32
  }
  func.func @transform_1(%arg0: i32, %arg1: i32, %arg2: memref<1xi32, #tpu.memory_space<smem>>) -> (i32, i32) {
    %0 = arith.index_cast %arg0 : i32 to index
    %1 = memref.load %arg2[%0] : memref<1xi32, #tpu.memory_space<smem>>
    %c1_i32 = arith.constant 1 : i32
    %2 = arith.subi %1, %c1_i32 : i32
    %3 = arith.minsi %arg1, %2 : i32
    %c0_i32 = arith.constant 0 : i32
    return %arg0, %3 : i32, i32
  }
  func.func @transform_2(%arg0: i32, %arg1: i32, %arg2: memref<1xi32, #tpu.memory_space<smem>>) -> (i32, i32) {
    %0 = arith.index_cast %arg0 : i32 to index
    %1 = memref.load %arg2[%0] : memref<1xi32, #tpu.memory_space<smem>>
    %c1_i32 = arith.constant 1 : i32
    %2 = arith.subi %1, %c1_i32 : i32
    %3 = arith.minsi %arg1, %2 : i32
    %c0_i32 = arith.constant 0 : i32
    return %arg0, %3 : i32, i32
  }
  func.func @transform_3(%arg0: i32, %arg1: i32, %arg2: memref<1xi32, #tpu.memory_space<smem>>) -> (i32, i32) {
    %c0_i32 = arith.constant 0 : i32
    return %arg0, %arg1 : i32, i32
  }
}

</mosaic_0001>

<llo_original>
// kernel: tpu_custom_call.1
$region0: #{tpu_custom_call.1}
  #allocation0 [shape = 'u32[]', space=smem, size = 0x4, offset = 0x4, fixed_abs, tag = 'smem constant byte address 0x4 - core index']
  #allocation1 [shape = 'u32[144,128]{1,0:T(1,128)}', space=vmem, size = 0x12000, scoped, tag = 'internal scratch']
  #allocation2 [shape = 's32[1]{0}', space=sflag, size = 0x4, scoped, tag = 'scoped memory for tpu_custom_call.1']
  #allocation3 [shape = 's32[1]{0:T(128)S(6)}', space=smem, size = 0x200, scoped, tag = 'prefetched SMEM operand 0']
  %s0 = inlined_call_operand.<no memory space> [shape: s32[1], index: 0, kind: input, shape index: {}]
  %s1 = inlined_call_operand.vmem [shape: s32[2,1], index: 1, kind: input, shape index: {}]
  %s2 = inlined_call_operand.vmem [shape: f32[2,256], index: 2, kind: input, shape index: {}]
  %s3 = inlined_call_operand.vmem [shape: f32[2,256], index: 3, kind: input, shape index: {}]
  %s4 = inlined_call_operand.hbm [shape: f32[2,128], index: 4, kind: output, shape index: {}]
  %s5 = sld [smem:[#allocation0]]
  $region30: #{tpu_custom_call.1} parent=0
    _
  %s7 = ssub.s32 1, %s5
  %s8 = scalar_select 0, %s7, %s5
  %9 = sst [smem:[#allocation3]] %s0
  $region1: #{tpu_custom_call.1} parent=0
    #allocation4 [shape = 'u8[1024]{0}', space=vmem, size = 0x400, scoped, tag = 'output window, operand 0, single buffered']
    #allocation5 [shape = 's32[1]{0}', space=sflag, size = 0x4, scoped, tag = 'scoped memory for tpu_custom_call.1']
    %10 = vsyncpa [#allocation5], 0
    // Predicated region
    $region2: #{tpu_custom_call.1} parent=1 // pred_check
      _
    $region3: #{tpu_custom_call.1} parent=1 // pred_check_branch
      %12 = sbr.rel (0) target = $region5
    $region4: #{tpu_custom_call.1} parent=1 // pred_region
      _
    $region5: #{tpu_custom_call.1} parent=1 // pred_fallthru
      _
    // Predicated region
    $region6: #{tpu_custom_call.1} parent=1 // pred_check
      _
    $region7: #{tpu_custom_call.1} parent=1 // pred_check_branch
      %14 = sbr.rel (0) target = $region9
    $region8: #{tpu_custom_call.1} parent=1 // pred_region
      %s15 = sld [smem:[#allocation3]]
      %s16 = ssub.s32 %s15, 1
      %p17 = scmp.lt.s32.totalorder 0, %s16
      %s18 = scalar_select %p17, 0, %s16
      %s19 = smul.u32 2, %s18
      %p20 = scmp.lt.s32.totalorder %s19, 1
      %s21 = scalar_select %p20, %s19, 1
      %s22 = smul.addr %s21, 2
      %s23 = scalar_lea.vmem %s2, %s22
      %s24 = sld [smem:[#allocation3]]
      %s25 = ssub.s32 %s24, 1
      %p26 = scmp.lt.s32.totalorder 0, %s25
      %s27 = scalar_select %p26, 0, %s25
      %s28 = smul.u32 2, %s27
    $region9: #{tpu_custom_call.1} parent=1 // pred_fallthru
      _
    // Predicated region
    $region10: #{tpu_custom_call.1} parent=1 // pred_check
      _
    $region11: #{tpu_custom_call.1} parent=1 // pred_check_branch
      %30 = sbr.rel (0) target = $region13
    $region12: #{tpu_custom_call.1} parent=1 // pred_region
      %s31 = sld [smem:[#allocation3]]
      %s32 = ssub.s32 %s31, 1
      %p33 = scmp.lt.s32.totalorder 0, %s32
      %s34 = scalar_select %p33, 0, %s32
      %s35 = smul.u32 2, %s34
      %p36 = scmp.lt.s32.totalorder %s35, 1
      %s37 = scalar_select %p36, %s35, 1
      %s38 = smul.addr %s37, 2
      %s39 = scalar_lea.vmem %s3, %s38
      %s40 = sld [smem:[#allocation3]]
      %s41 = ssub.s32 %s40, 1
      %p42 = scmp.lt.s32.totalorder 0, %s41
      %s43 = scalar_select %p42, 0, %s41
      %s44 = smul.u32 2, %s43
    $region13: #{tpu_custom_call.1} parent=1 // pred_fallthru
      _
    %s45 = sld [smem:[#allocation3]]
    %s46 = ssub.s32 %s45, 1
    %p47 = scmp.lt.s32.totalorder 0, %s46
    %s48 = scalar_select %p47, 0, %s46
    %s49 = smul.u32 2, %s48
    %p50 = scmp.lt.s32.totalorder %s49, 1
    %s51 = scalar_select %p50, %s49, 1
    %s52 = smul.addr %s51, 2
    %s53 = scalar_lea.vmem %s2, %s52
    %s54 = sld [smem:[#allocation3]]
    %s55 = ssub.s32 %s54, 1
    %p56 = scmp.lt.s32.totalorder 0, %s55
    %s57 = scalar_select %p56, 0, %s55
    %s58 = smul.u32 2, %s57
    %p59 = scmp.lt.s32.totalorder %s58, 1
    %s60 = scalar_select %p59, %s58, 1
    %s61 = smul.addr %s60, 2
    %s62 = scalar_lea.vmem %s3, %s61
    %s63 = sld [smem:[#allocation3]]
    %s64 = ssub.s32 %s63, 1
    %p65 = scmp.lt.s32.totalorder 0, %s64
    %s66 = scalar_select %p65, 0, %s64
    %s67 = smul.u32 2, %s66
    %p68 = scmp.lt.s32.totalorder %s67, 1
    %s69 = scalar_select %p68, %s67, 1
    %s70 = smul.addr %s69, 2
    %s71 = scalar_lea.vmem %s2, %s70
    %s72 = sld [smem:[#allocation3]]
    %s73 = ssub.s32 %s72, 1
    %p74 = scmp.lt.s32.totalorder 0, %s73
    %s75 = scalar_select %p74, 0, %s73
    %s76 = smul.u32 2, %s75
    %s77 = sld [smem:[#allocation3]]
    %s78 = ssub.s32 %s77, 1
    %p79 = scmp.lt.s32.totalorder 0, %s78
    %s80 = scalar_select %p79, 0, %s78
    %s81 = smul.u32 2, %s80
    %p82 = scmp.lt.s32.totalorder %s81, 1
    %s83 = scalar_select %p82, %s81, 1
    %s84 = smul.addr %s83, 2
    %s85 = scalar_lea.vmem %s3, %s84
    %s86 = sld [smem:[#allocation3]]
    %s87 = ssub.s32 %s86, 1
    %p88 = scmp.lt.s32.totalorder 0, %s87
    %s89 = scalar_select %p88, 0, %s87
    %s90 = smul.u32 2, %s89
    %s91 = sld [smem:[#allocation3]]
    %p92 = scmp.lt.s32.totalorder 0, %s91
    // Predicated region
    $region14: #{tpu_custom_call.1} parent=1 // pred_check
      %p93 = pneg %p92
    $region15: #{tpu_custom_call.1} parent=1 // pred_check_branch
      %95 = sbr.rel (%p93) target = $region17
    $region16: #{tpu_custom_call.1} parent=1 // pred_region
      %v96 = vld [vmem:[%s1] sm:$0x3]
      %s97 = smul.u32 0, 256
      %v98 = vstv %s97
      %v99 = vsub.s32 %v96, %v98
      %v100 = vlaneseq
      %v101 = vand.u32 %v100, 127
      %v102 = vld [vmem:[%s71] sm:$0x3]
      %v103 = vld [vmem:[%s85] sm:$0x3]
      %v104 = vsub.f32 %v102, %v103
      %105 = vset.pattern.permute.xlu0 0
      %106 = vperm.xlu0 %105, %v99
      %v107 = vpop.permute.xlu0 %106
      %vm108 = vcmp.lt.s32.totalorder %v101, %v107
      %v109 = vmul.f32 %v104, %v104
      %v110 = vsel %vm108, %v109, 0.0
      %v111 = vadd.f32 %v110, 0.0
      %v112 = vld [vmem:[%s71 + $0x2] sm:$0x3]
      %v113 = vld [vmem:[%s85 + $0x2] sm:$0x3]
      %v114 = vsub.f32 %v112, %v113
      %v115 = vadd.s32 %v101, 128
      %vm116 = vcmp.lt.s32.totalorder %v115, %v107
      %v117 = vmul.f32 %v114, %v114
      %v118 = vsel %vm116, %v117, 0.0
      %v119 = vadd.f32 %v111, %v118
      %120 = vst [vmem:[#allocation4] sm:$0x3] %v119
    $region17: #{tpu_custom_call.1} parent=1 // pred_fallthru
      _
    %s121 = sld [smem:[#allocation3]]
    %p122 = scmp.ge.s32.totalorder 0, %s121
    // Predicated region
    $region18: #{tpu_custom_call.1} parent=1 // pred_check
      %p123 = pneg %p122
    $region19: #{tpu_custom_call.1} parent=1 // pred_check_branch
      %125 = sbr.rel (%p123) target = $region21
    $region20: #{tpu_custom_call.1} parent=1 // pred_region
      %126 = vst [vmem:[#allocation4] sm:$0x3] 0.0
    $region21: #{tpu_custom_call.1} parent=1 // pred_fallthru
      _
    // Predicated region
    $region22: #{tpu_custom_call.1} parent=1 // pred_check
      _
    $region23: #{tpu_custom_call.1} parent=1 // pred_check_branch
      %128 = sbr.rel (0) target = $region25
    $region24: #{tpu_custom_call.1} parent=1 // pred_region
      %s130 = ssub.s32 32, 32
      %131 = vsyncadd [#allocation5], %s130
      %s133 = sshll.u32 [#allocation4], 4
      %s134 = int_to_ptr.vmem [resolvable:$true] %s133
      %136 = dma.vmem_to_hbm [thread:$0]  %s134, 32, %s4, [#allocation5]
    $region25: #{tpu_custom_call.1} parent=1 // pred_fallthru
      _
    // Predicated region
    $region26: #{tpu_custom_call.1} parent=1 // pred_check
      _
    $region27: #{tpu_custom_call.1} parent=1 // pred_check_branch
      %138 = sbr.rel (0) target = $region29
    $region28: #{tpu_custom_call.1} parent=1 // pred_region
      %139 = dma.done [#allocation5], 32
    $region29: #{tpu_custom_call.1} parent=1 // pred_fallthru
      _
    %140 = vsyncpa [#allocation5], 1

</llo_original>
